<compile_context>
chip_gen: v7x
topology: tpu7x:2x2x1
jax: 0.10.0
libtpu: 0.0.40
codegen_flags: <defaults>
</compile_context>

<pallas_src>
import math

import jax
import jax.numpy as jnp
from jax.experimental import pallas as pl
from jax.experimental.pallas import tpu as pltpu


def _locked_dropout_kernel(mask_ref, x_ref, o_ref):
    # mask_ref: (mrows, BH); x_ref / o_ref: (tT, BH).
    m_rows, bh = mask_ref.shape
    t_rows = x_ref.shape[0]
    x = x_ref[...]
    m = mask_ref[...]
    if m_rows == t_rows or m_rows == 1:
        # Exact shape or simple sublane broadcast.
        o_ref[...] = x * m
    else:
        # Mask is one full sublane group; reuse its vregs across every
        # sublane group of the tile.  Leading-dim split/merge is layout-free
        # (last two dims stay (sub_pack, BH), tile-aligned).
        o_ref[...] = (
            x.reshape(t_rows // m_rows, m_rows, bh) * m[None, :, :]
        ).reshape(t_rows, bh)


def _round_up(v, m):
    return -(-v // m) * m


def _lane_fold(T, BH):
    """Smallest k such that k*BH is a multiple of 128 and k divides T."""
    k = 128 // math.gcd(BH, 128)
    if k > 1 and T % k == 0:
        return k
    return 1


def _choose_time_tile(T, BH, itemsize, target_bytes, sub_pack):
    """Pick a time-tile of ~target_bytes, rounded to the sublane packing."""
    rows = max(1, target_bytes // max(1, BH * itemsize))
    if rows >= T:
        # Whole array fits one tile.  Never leave the grid at a single block
        # for non-trivial arrays: v7x has 2 TensorCores sharding the
        # "parallel" axis, so split in two when there is enough to split.
        if T >= 2 * sub_pack:
            return min(T, _round_up(-(-T // 2), sub_pack))
        return T
    rows = max(sub_pack, (rows // sub_pack) * sub_pack)
    rows = min(rows, T)
    # Prefer an even number of grid blocks (both TCs stay busy, no lone tail).
    nblk = -(-T // rows)
    if nblk > 1 and nblk % 2 == 1:
        alt = _round_up(-(-T // (nblk + 1)), sub_pack)
        if alt >= sub_pack:
            rows = min(rows, alt)
    return rows


def _make_locked_mask(key, p, B, H, dtype):
    """(1, B, H) mask with values in {0, 1/(1-p)}; computed in f32, cast once."""
    keep_prob = 1.0 - float(p)
    keep = jax.random.bernoulli(key, keep_prob, (1, B, H))
    mask_f32 = keep.astype(jnp.float32) * jnp.float32(1.0 / keep_prob)
    return mask_f32.astype(dtype)


def _apply_locked_mask(x2d, mask_row, *, block_bytes, donate_x=False):
    """x2d: (T, BH), mask_row: (1, BH) -> (T, BH) via a streaming Pallas kernel."""
    T, BH = x2d.shape
    itemsize = x2d.dtype.itemsize
    sub_pack = max(8, 32 // itemsize)         # 8 f32, 16 bf16, 32 int8/fp8

    tT = _choose_time_tile(T, BH, itemsize, block_bytes, sub_pack)

    # Replicate the mask to a full sublane group when the tile allows it so
    # the kernel multiplies against resident mask vregs with no broadcast.
    mrows = sub_pack if (tT % sub_pack == 0) else 1
    mask2d = jnp.broadcast_to(mask_row, (mrows, BH)) if mrows > 1 else mask_row

    grid = (pl.cdiv(T, tT),)

    # Explicit scoped-VMEM budget: double-buffered input + output tiles, the
    # resident mask, plus headroom for internal scratch.  Capped well under
    # v7x physical VMEM (64 MiB); always within v5e/v6e physical (128 MiB).
    tile_bytes = tT * BH * itemsize
    vmem_limit = 4 * tile_bytes + 2 * mrows * BH * itemsize + (2 << 20)
    vmem_limit = int(max(8 << 20, min(vmem_limit, 48 << 20)))

    extra = {}
    if donate_x:
        extra["input_output_aliases"] = {1: 0}   # alias x2d -> output

    return pl.pallas_call(
        _locked_dropout_kernel,
        out_shape=jax.ShapeDtypeStruct((T, BH), x2d.dtype),
        grid=grid,
        in_specs=[
            # Same mask block for every grid step (temporal consistency);
            # stays VMEM-resident because its block index never changes.
            pl.BlockSpec((mrows, BH), lambda i: (0, 0)),
            # If profiling shows exposed DMA, sweep pipeline_mode=pl.Buffered(3)
            # here (VMEM budget above leaves room on v6e/v7x).
            pl.BlockSpec((tT, BH), lambda i: (i, 0)),
        ],
        out_specs=pl.BlockSpec((tT, BH), lambda i: (i, 0)),
        compiler_params=pltpu.CompilerParams(
            dimension_semantics=("parallel",),
            vmem_limit_bytes=vmem_limit,
        ),
        **extra,
    )(mask2d, x2d)


def locked_dropout(x, p, key, *, training=True,
                   block_bytes=4 * 1024 * 1024, donate_x=False):
    """LockedDropout forward.  x: (T, B, H)."""
    if not training or p == 0.0:
        return x
    if not (0.0 <= float(p) < 1.0):
        raise ValueError(f"dropout p must be in [0, 1), got {p}")

    T, B, H = x.shape
    BH = B * H
    mask_row = _make_locked_mask(key, p, B, H, x.dtype).reshape(1, BH)

    # Lane-dense layout: fold k consecutive time steps into the lane axis so
    # the output last dim is a multiple of 128 (avoids masked partial stores).
    k = _lane_fold(T, BH)
    if k > 1:
        x2d = x.reshape(T // k, k * BH)
        mask_row = jnp.tile(mask_row, (1, k))   # same mask for each folded step
    else:
        x2d = x.reshape(T, BH)

    out2d = _apply_locked_mask(x2d, mask_row,
                               block_bytes=block_bytes, donate_x=donate_x)
    return out2d.reshape(T, B, H)


def _check_case(T, B, H, p, key):
    kx, kmask = jax.random.split(key)
    x = jax.random.normal(kx, (T, B, H), dtype=jnp.float32)

    out = locked_dropout(x, p, kmask, training=True)
    out = jax.block_until_ready(out)

    # Reference: same mask from the same key, applied with plain JAX.
    mask_ref = _make_locked_mask(kmask, p, B, H, x.dtype)      # (1, B, H)
    ref = x * mask_ref
    assert bool(jnp.allclose(out, ref)), "kernel output != reference"

    # Mask values in {0, 1/(1-p)} and identical across all time steps.
    ratio = out / x                              # x ~ N(0,1), nonzero a.s.
    keep_scale = 1.0 / (1.0 - p)
    is_zero = jnp.isclose(ratio, 0.0, atol=1e-5)
    is_keep = jnp.isclose(ratio, keep_scale, atol=1e-4)
    assert bool(jnp.all(is_zero | is_keep)), "mask values not in {0, 1/(1-p)}"
    assert bool(jnp.all(jnp.isclose(ratio, ratio[0:1], atol=1e-4))), (
        "mask differs across time steps"
    )

    # Eval mode and p == 0 are identity.
    assert bool(jnp.all(locked_dropout(x, p, kmask, training=False) == x))
    assert bool(jnp.all(locked_dropout(x, 0.0, kmask, training=True) == x))


if __name__ == "__main__":
    key = jax.random.PRNGKey(0)
    k1, k2 = jax.random.split(key)

    # Small shape from the spec: single folded block, broadcast-mask path.
    _check_case(T=8, B=2, H=32, p=0.5, key=k1)

    # Larger shape: exercises lane-folding, multi-block grid and the
    # sublane-replicated-mask path.
    _check_case(T=64, B=4, H=48, p=0.25, key=k2)

    print("KERNEL_OK")
</pallas_src>

<mosaic_0001>
module attributes {stable_mosaic.version = 11 : i64} {
  func.func @_locked_dropout_kernel(%arg0: i32, %arg1: memref<1x128xf32, #tpu.memory_space<vmem>>, %arg2: memref<4x128xf32, #tpu.memory_space<vmem>>, %arg3: memref<4x128xf32, #tpu.memory_space<vmem>>) attributes {dimension_semantics = [#tpu.dimension_semantics<parallel>], iteration_bounds = array<i64: 1>, scalar_prefetch = 0 : i64, scratch_operands = 0 : i64, tpu.core_type = #tpu.core_type<tc>, window_params = [{pipeline_mode = #tpu.pipeline_mode<synchronous>, transform_indices = @transform_0, window_bounds = array<i64: 1, 128>}, {transform_indices = @transform_1, window_bounds = array<i64: 4, 128>}, {transform_indices = @transform_2, window_bounds = array<i64: 4, 128>}]} {
    %c0 = arith.constant 0 : index
    %c0_0 = arith.constant 0 : index
    %0 = vector.load %arg2[%c0, %c0_0] : memref<4x128xf32, #tpu.memory_space<vmem>>, vector<4x128xf32>
    %c0_1 = arith.constant 0 : index
    %c0_2 = arith.constant 0 : index
    %1 = vector.load %arg1[%c0_1, %c0_2] : memref<1x128xf32, #tpu.memory_space<vmem>>, vector<1x128xf32>
    %2 = vector.broadcast %1 : vector<1x128xf32> to vector<4x128xf32>
    %3 = arith.mulf %0, %2 : vector<4x128xf32>
    %c0_3 = arith.constant 0 : index
    %c0_4 = arith.constant 0 : index
    %4 = vector.load %arg3[%c0_3, %c0_4] : memref<4x128xf32, #tpu.memory_space<vmem>>, vector<4x128xf32>
    tpu.vector_store %arg3[%c0_3, %c0_4], %3 {strides = array<i32>} : memref<4x128xf32, #tpu.memory_space<vmem>>, vector<4x128xf32>,
    return
  }
  func.func @transform_0(%arg0: i32) -> (i32, i32) {
    %c0_i32 = arith.constant 0 : i32
    %c0_i32_0 = arith.constant 0 : i32
    %c0_i32_1 = arith.constant 0 : i32
    return %c0_i32, %c0_i32_0 : i32, i32
  }
  func.func @transform_1(%arg0: i32) -> (i32, i32) {
    %c0_i32 = arith.constant 0 : i32
    %c0_i32_0 = arith.constant 0 : i32
    return %arg0, %c0_i32 : i32, i32
  }
  func.func @transform_2(%arg0: i32) -> (i32, i32) {
    %c0_i32 = arith.constant 0 : i32
    %c0_i32_0 = arith.constant 0 : i32
    return %arg0, %c0_i32 : i32, i32
  }
}

</mosaic_0001>

<llo_original>
// kernel: tpu_custom_call.1
$region0: #{tpu_custom_call.1}
  #allocation0 [shape = 'u32[]', space=smem, size = 0x4, offset = 0x4, fixed_abs, tag = 'smem constant byte address 0x4 - core index']
  #allocation1 [shape = 'u32[144,128]{1,0:T(1,128)}', space=vmem, size = 0x12000, scoped, tag = 'internal scratch']
  %s0 = inlined_call_operand.hbm [shape: f32[1,128], index: 0, kind: input, shape index: {}]
  %s1 = inlined_call_operand.hbm [shape: f32[4,128], index: 1, kind: input, shape index: {}]
  %s2 = inlined_call_operand.hbm [shape: f32[4,128], index: 2, kind: output, shape index: {}]
  %s3 = sld [smem:[#allocation0]]
  $region26: #{tpu_custom_call.1} parent=0
    _
  %s5 = ssub.s32 1, %s3
  %s6 = scalar_select 0, %s5, %s3
  $region1: #{tpu_custom_call.1} parent=0
    #allocation2 [shape = 'u8[512]{0}', space=vmem, size = 0x400, scoped, tag = 'input window, operand 0, single buffered']
    #allocation3 [shape = 's32[1]{0}', space=sflag, size = 0x4, scoped, tag = 'scoped memory for tpu_custom_call.1']
    #allocation4 [shape = 's32[1]{0}', space=sflag, size = 0x4, scoped, tag = 'scoped memory for tpu_custom_call.1']
    #allocation5 [shape = 'u8[2048]{0}', space=vmem, size = 0x800, scoped, tag = 'input window, operand 1, single buffered']
    #allocation6 [shape = 's32[1]{0}', space=sflag, size = 0x4, scoped, tag = 'scoped memory for tpu_custom_call.1']
    #allocation7 [shape = 'u8[2048]{0}', space=vmem, size = 0x800, scoped, tag = 'output window, operand 0, single buffered']
    %7 = vsyncpa [#allocation3], 0
    %8 = vsyncpa [#allocation6], 0
    %9 = vsyncpa [#allocation4], 0
    // Predicated region
    $region2: #{tpu_custom_call.1} parent=1 // pred_check
      _
    $region3: #{tpu_custom_call.1} parent=1 // pred_check_branch
      %11 = sbr.rel (0) target = $region5
    $region4: #{tpu_custom_call.1} parent=1 // pred_region
      %s13 = ssub.s32 16, 16
      %14 = vsyncadd [#allocation3], %s13
      %s16 = sshll.u32 [#allocation2], 4
      %s17 = int_to_ptr.vmem [resolvable:$true] %s16
      %19 = dma.hbm_to_vmem [thread:$0]  %s0, 16, %s17, [#allocation3]
    $region5: #{tpu_custom_call.1} parent=1 // pred_fallthru
      _
    // Predicated region
    $region6: #{tpu_custom_call.1} parent=1 // pred_check
      _
    $region7: #{tpu_custom_call.1} parent=1 // pred_check_branch
      %21 = sbr.rel (0) target = $region9
    $region8: #{tpu_custom_call.1} parent=1 // pred_region
      %s23 = ssub.s32 64, 64
      %24 = vsyncadd [#allocation6], %s23
      %s26 = sshll.u32 [#allocation5], 4
      %s27 = int_to_ptr.vmem [resolvable:$true] %s26
      %29 = dma.hbm_to_vmem [thread:$0]  %s1, 64, %s27, [#allocation6]
    $region9: #{tpu_custom_call.1} parent=1 // pred_fallthru
      _
    // Predicated region
    $region10: #{tpu_custom_call.1} parent=1 // pred_check
      _
    $region11: #{tpu_custom_call.1} parent=1 // pred_check_branch
      %31 = sbr.rel (0) target = $region13
    $region12: #{tpu_custom_call.1} parent=1 // pred_region
      %32 = dma.done [#allocation3], 16
    $region13: #{tpu_custom_call.1} parent=1 // pred_fallthru
      _
    // Predicated region
    $region14: #{tpu_custom_call.1} parent=1 // pred_check
      _
    $region15: #{tpu_custom_call.1} parent=1 // pred_check_branch
      %34 = sbr.rel (0) target = $region17
    $region16: #{tpu_custom_call.1} parent=1 // pred_region
      %35 = dma.done [#allocation6], 64
    $region17: #{tpu_custom_call.1} parent=1 // pred_fallthru
      _
    %v36 = vld [vmem:[#allocation5] sm:$0xf]
    %v37 = vld [vmem:[#allocation2] sm:$0x1]
    %v39 = vlaneseq
    %v40 = vshrl.u32 %v39, 7
    %v41 = vsub.s32 0, %v40
    %v42 = vrot.slane %v37, %v41
    %v44 = vmul.f32 %v36, %v42
    %45 = vst [vmem:[#allocation7] sm:$0xf] %v44
    // Predicated region
    $region18: #{tpu_custom_call.1} parent=1 // pred_check
      _
    $region19: #{tpu_custom_call.1} parent=1 // pred_check_branch
      %47 = sbr.rel (0) target = $region21
    $region20: #{tpu_custom_call.1} parent=1 // pred_region
      %s49 = ssub.s32 64, 64
      %50 = vsyncadd [#allocation4], %s49
      %s52 = sshll.u32 [#allocation7], 4
      %s53 = int_to_ptr.vmem [resolvable:$true] %s52
      %55 = dma.vmem_to_hbm [thread:$0]  %s53, 64, %s2, [#allocation4]
    $region21: #{tpu_custom_call.1} parent=1 // pred_fallthru
      _
    // Predicated region
    $region22: #{tpu_custom_call.1} parent=1 // pred_check
      _
    $region23: #{tpu_custom_call.1} parent=1 // pred_check_branch
      %57 = sbr.rel (0) target = $region25
    $region24: #{tpu_custom_call.1} parent=1 // pred_region
      %58 = dma.done [#allocation4], 64
    $region25: #{tpu_custom_call.1} parent=1 // pred_fallthru
      _
    %59 = vsyncpa [#allocation3], 1
    %60 = vsyncpa [#allocation6], 1
    %61 = vsyncpa [#allocation4], 1

</llo_original>
